<compile_context>
chip_gen: v5e
topology: v5e:2x2
jax: 0.10.0
libtpu: 0.0.40
codegen_flags: <defaults>
</compile_context>

<pallas_src>
import functools
from typing import NamedTuple

import jax
import jax.numpy as jnp
from jax import lax
from jax.experimental import pallas as pl
from jax.experimental.pallas import tpu as pltpu


LANE = 128
SUBLANE = 8


def _round_up(v, m):
    return (v + m - 1) // m * m


class OctopusDims(NamedTuple):
    n_rel: int
    n_nodes: int
    fin: int
    hid: int
    fout: int
    e_pad: int
    c_pad: int
    n_edges: int
    n_classes: int
    p_rows: int
    stride_w1: int
    stride_w2: int
    off_w1: int
    off_b1: int
    off_w2: int
    off_b2: int
    off_wp: int
    off_bp: int


# ----------------------------------------------------------------------------- kernel

def _octopus_kernel(adj_ref, x_ref, param_ref, idx_ref, out_ref,
                    xw_ref, hw_ref, *, dims: OctopusDims):
    """Fused Octopus forward.

    adj_ref:   [N, R*N]       adj[:, r*N:(r+1)*N] = N_r (normalized adjacency)
    x_ref:     [N, Fin]
    param_ref: [P_rows, C_pad] packed parameter slab (static row offsets)
    idx_ref:   [2*E_pad, 1]   int32 endpoints: rows [0:E_pad)=src, [E_pad:2E_pad)=dst
    out_ref:   [E_pad, C_pad] lane-dense score slab
    xw_ref:    [R*N, H]       scratch (row-stacked X @ W1_r)
    hw_ref:    [R*N, Fout]    scratch (row-stacked h1 @ W2_r)
    """
    R, N = dims.n_rel, dims.n_nodes
    Fin, H, Fout = dims.fin, dims.hid, dims.fout
    Ep, Cp = dims.e_pad, dims.c_pad

    adj_cat = adj_ref[...]                                             # [N, R*N]
    x = x_ref[...]                                                     # [N, Fin]

    # ---- layer 1: h1 = relu( sum_r N_r @ (X @ W1_r) + sum_r b1_r )
    # Per-relation X@W1_r written straight into tile-aligned scratch rows; the
    # relation sum happens inside the single wide adjacency matmul (MXU f32 acc).
    for r in range(R):
        w1_r = param_ref[dims.off_w1 + r * dims.stride_w1:
                         dims.off_w1 + r * dims.stride_w1 + Fin, :H]
        xw_ref[r * N:(r + 1) * N, :] = jnp.dot(
            x, w1_r, preferred_element_type=jnp.float32)
    b1s = param_ref[dims.off_b1:dims.off_b1 + 1, :H]                   # [1, H]
    h1 = jnp.maximum(
        jnp.dot(adj_cat, xw_ref[...], preferred_element_type=jnp.float32) + b1s,
        0.0)

    # ---- layer 2: h2 = sum_r N_r @ (h1 @ W2_r) + sum_r b2_r
    # (weights applied before the adjacency matmul: Fout < H -> fewer MXU columns)
    for r in range(R):
        w2_r = param_ref[dims.off_w2 + r * dims.stride_w2:
                         dims.off_w2 + r * dims.stride_w2 + H, :Fout]
        hw_ref[r * N:(r + 1) * N, :] = jnp.dot(
            h1, w2_r, preferred_element_type=jnp.float32)
    b2s = param_ref[dims.off_b2:dims.off_b2 + 1, :Fout]                # [1, Fout]
    h2 = jnp.dot(adj_cat, hw_ref[...], preferred_element_type=jnp.float32) + b2s

    # ---- dec_graph endpoint gather: ONE fused one-hot selection matmul
    # (src and dst rows stacked -> single [2*E_pad, N] x [N, Fout] MXU push).
    idx = idx_ref[...]                                                 # [2*E_pad, 1]
    iota = lax.broadcasted_iota(jnp.int32, (2 * Ep, N), 1)
    sel = (iota == idx).astype(jnp.float32)                            # [2*E_pad, N]
    gathered = jnp.dot(sel, h2, preferred_element_type=jnp.float32)    # [2*E_pad, Fout]

    # ---- HeteroMLPPredictor fused: [h_src | h_dst] @ [Wp_src; Wp_dst] + bp
    h_cat = jnp.concatenate([gathered[:Ep], gathered[Ep:]], axis=1)    # [E_pad, 2*Fout]
    wp = param_ref[dims.off_wp:dims.off_wp + 2 * Fout, :Cp]            # [2*Fout, C_pad]
    bp = param_ref[dims.off_bp:dims.off_bp + 1, :Cp]                   # [1, C_pad]
    out_ref[...] = jnp.dot(h_cat, wp, preferred_element_type=jnp.float32) + bp


# ----------------------------------------------------------------------------- wrappers

def prepare_inputs(adj_norm, src_idx, dst_idx, params):
    """One-time preprocessing: graph packing + parameter slab packing (off the hot path)."""
    n_rel, n_dst, n_src = adj_norm.shape
    fin, hid = params["w1"].shape[1], params["w1"].shape[2]
    fout = params["w2"].shape[2]
    n_cls = params["wp_src"].shape[1]

    # horizontally-concatenated normalized adjacency: [N, R*N]
    adj_cat = jnp.swapaxes(adj_norm, 0, 1).reshape(n_dst, n_rel * n_src).astype(jnp.float32)

    n_edges = int(src_idx.shape[0])
    e_pad = _round_up(max(n_edges, 1), SUBLANE)
    c_pad = _round_up(max(hid, fout, n_cls), LANE)

    # -- parameter slab: 8-row-aligned sections so all in-kernel slices are tile-aligned
    stride_w1 = _round_up(fin, SUBLANE)
    stride_w2 = _round_up(hid, SUBLANE)
    off_w1 = 0
    off_b1 = _round_up(off_w1 + n_rel * stride_w1, SUBLANE)
    off_w2 = _round_up(off_b1 + 1, SUBLANE)
    off_b2 = _round_up(off_w2 + n_rel * stride_w2, SUBLANE)
    off_wp = _round_up(off_b2 + 1, SUBLANE)
    off_bp = _round_up(off_wp + 2 * fout, SUBLANE)
    p_rows = _round_up(off_bp + 1, SUBLANE)

    slab = jnp.zeros((p_rows, c_pad), jnp.float32)
    for r in range(n_rel):
        slab = slab.at[off_w1 + r * stride_w1: off_w1 + r * stride_w1 + fin, :hid].set(
            params["w1"][r].astype(jnp.float32))
        slab = slab.at[off_w2 + r * stride_w2: off_w2 + r * stride_w2 + hid, :fout].set(
            params["w2"][r].astype(jnp.float32))
    slab = slab.at[off_b1, :hid].set(params["b1"].sum(axis=0).astype(jnp.float32))
    slab = slab.at[off_b2, :fout].set(params["b2"].sum(axis=0).astype(jnp.float32))
    slab = slab.at[off_wp:off_wp + fout, :n_cls].set(params["wp_src"].astype(jnp.float32))
    slab = slab.at[off_wp + fout:off_wp + 2 * fout, :n_cls].set(
        params["wp_dst"].astype(jnp.float32))
    slab = slab.at[off_bp, :n_cls].set(params["bp"].reshape(-1).astype(jnp.float32))

    # -- index slab: src rows stacked over dst rows (pad rows -> node 0, sliced off later)
    idx_slab = jnp.zeros((2 * e_pad, 1), jnp.int32)
    idx_slab = idx_slab.at[:n_edges, 0].set(src_idx.astype(jnp.int32))
    idx_slab = idx_slab.at[e_pad:e_pad + n_edges, 0].set(dst_idx.astype(jnp.int32))

    dims = OctopusDims(
        n_rel=n_rel, n_nodes=n_dst, fin=fin, hid=hid, fout=fout,
        e_pad=e_pad, c_pad=c_pad, n_edges=n_edges, n_classes=n_cls,
        p_rows=p_rows, stride_w1=stride_w1, stride_w2=stride_w2,
        off_w1=off_w1, off_b1=off_b1, off_w2=off_w2, off_b2=off_b2,
        off_wp=off_wp, off_bp=off_bp)
    return adj_cat, slab, idx_slab, dims


@functools.partial(jax.jit, static_argnames=("dims",))
def octopus_forward(adj_cat, x, param_slab, idx_slab, dims: OctopusDims):
    """Full Octopus.forward as a single fused Pallas kernel (one dispatch, 4 input DMAs)."""
    vmem = pl.BlockSpec(memory_space=pltpu.MemorySpace.VMEM)
    kernel = functools.partial(_octopus_kernel, dims=dims)

    flops = 2 * (dims.n_rel * dims.n_nodes * dims.fin * dims.hid
                 + dims.n_nodes * dims.n_rel * dims.n_nodes * dims.hid
                 + dims.n_rel * dims.n_nodes * dims.hid * dims.fout
                 + dims.n_nodes * dims.n_rel * dims.n_nodes * dims.fout
                 + 2 * dims.e_pad * dims.n_nodes * dims.fout
                 + dims.e_pad * 2 * dims.fout * dims.c_pad)
    bytes_accessed = 4 * (dims.n_nodes * dims.n_rel * dims.n_nodes
                          + dims.n_nodes * dims.fin
                          + dims.p_rows * dims.c_pad
                          + 2 * dims.e_pad
                          + dims.e_pad * dims.c_pad)

    out = pl.pallas_call(
        kernel,
        out_shape=jax.ShapeDtypeStruct((dims.e_pad, dims.c_pad), jnp.float32),
        in_specs=[vmem, vmem, vmem, vmem],
        out_specs=vmem,
        scratch_shapes=[
            pltpu.VMEM((dims.n_rel * dims.n_nodes, dims.hid), jnp.float32),
            pltpu.VMEM((dims.n_rel * dims.n_nodes, dims.fout), jnp.float32),
        ],
        cost_estimate=pl.CostEstimate(
            flops=flops, transcendentals=0, bytes_accessed=bytes_accessed),
    )(adj_cat, x, param_slab, idx_slab)
    return out[:dims.n_edges, :dims.n_classes]


def octopus_reference(adj_norm, x, src_idx, dst_idx, params):
    """Pure-JAX reference of the same math (for correctness check)."""
    acc1 = jnp.einsum("rnm,mf,rfh->nh", adj_norm, x, params["w1"]) \
        + params["b1"].sum(0)[None, :]
    h1 = jnp.maximum(acc1, 0.0)
    acc2 = jnp.einsum("rnm,mh,rho->no", adj_norm, h1, params["w2"]) \
        + params["b2"].sum(0)[None, :]
    h_src, h_dst = acc2[src_idx], acc2[dst_idx]
    return h_src @ params["wp_src"] + h_dst @ params["wp_dst"] + params["bp"]


# ----------------------------------------------------------------------------- main

if __name__ == "__main__":
    # Small shapes consistent with the module
    num_teams = 16
    in_features = 8
    hidden_features = 32
    out_features = 16
    rel_names = ["wins", "loses", "draws"]          # -> n_classes = 3
    n_rel = len(rel_names)
    n_dec_edges = 8

    key = jax.random.PRNGKey(0)
    keys = jax.random.split(key, 12)

    # Node features (node type 'team')
    x = jax.random.normal(keys[0], (num_teams, in_features), jnp.float32)

    # Synthetic per-relation adjacency A_r[u, v] = 1 iff edge u -> v
    adj = jax.random.bernoulli(keys[1], 0.3,
                               (n_rel, num_teams, num_teams)).astype(jnp.float32)
    d_out = jnp.clip(adj.sum(axis=2), 1.0, None)    # out-degree of src nodes
    d_in = jnp.clip(adj.sum(axis=1), 1.0, None)     # in-degree of dst nodes
    # N_r = D_in^{-1/2} A_r^T D_out^{-1/2}   -> shape [R, n_dst, n_src]
    adj_norm = (d_in[:, :, None] ** -0.5) * jnp.swapaxes(adj, 1, 2) \
        * (d_out[:, None, :] ** -0.5)

    # dec_graph edges ('team' -> 'team')
    src_idx = jax.random.randint(keys[2], (n_dec_edges,), 0, num_teams)
    dst_idx = jax.random.randint(keys[3], (n_dec_edges,), 0, num_teams)

    # Deterministic parameter init (shapes follow the module __init__)
    params = {
        "w1": 0.2 * jax.random.normal(keys[4], (n_rel, in_features, hidden_features),
                                      jnp.float32),
        "b1": 0.1 * jax.random.normal(keys[5], (n_rel, hidden_features), jnp.float32),
        "w2": 0.2 * jax.random.normal(keys[6], (n_rel, hidden_features, out_features),
                                      jnp.float32),
        "b2": 0.1 * jax.random.normal(keys[7], (n_rel, out_features), jnp.float32),
        # HeteroMLPPredictor: Linear(out_features*2, n_classes) split into src/dst halves
        "wp_src": 0.2 * jax.random.normal(keys[8], (out_features, n_rel), jnp.float32),
        "wp_dst": 0.2 * jax.random.normal(keys[9], (out_features, n_rel), jnp.float32),
        "bp": 0.1 * jax.random.normal(keys[10], (1, n_rel), jnp.float32),
    }

    adj_cat, param_slab, idx_slab, dims = prepare_inputs(
        adj_norm, src_idx, dst_idx, params)

    scores = octopus_forward(adj_cat, x, param_slab, idx_slab, dims)
    scores = jax.block_until_ready(scores)

    ref = octopus_reference(adj_norm, x, src_idx, dst_idx, params)
    assert scores.shape == (n_dec_edges, n_rel)
    assert jnp.allclose(scores, ref, rtol=1e-4, atol=1e-4), "mismatch vs. reference"

    print("KERNEL_OK")
</pallas_src>

<mosaic_0001>
module attributes {stable_mosaic.version = 11 : i64} {
  func.func @_octopus_kernel(%arg0: memref<16x48xf32, #tpu.memory_space<vmem>>, %arg1: memref<16x8xf32, #tpu.memory_space<vmem>>, %arg2: memref<176x128xf32, #tpu.memory_space<vmem>>, %arg3: memref<16x1xi32, #tpu.memory_space<vmem>>, %arg4: memref<8x128xf32, #tpu.memory_space<vmem>>, %arg5: memref<48x32xf32, #tpu.memory_space<vmem>>, %arg6: memref<48x16xf32, #tpu.memory_space<vmem>>) attributes {dimension_semantics = [], scalar_prefetch = 0 : i64, scratch_operands = 2 : i64, tpu.core_type = #tpu.core_type<tc>} {
    %c0 = arith.constant 0 : index
    %c0_0 = arith.constant 0 : index
    %0 = vector.load %arg0[%c0, %c0_0] : memref<16x48xf32, #tpu.memory_space<vmem>>, vector<16x48xf32>
    %c0_1 = arith.constant 0 : index
    %c0_2 = arith.constant 0 : index
    %1 = vector.load %arg1[%c0_1, %c0_2] : memref<16x8xf32, #tpu.memory_space<vmem>>, vector<16x8xf32>
    %c0_3 = arith.constant 0 : index
    %c0_4 = arith.constant 0 : index
    %2 = vector.load %arg2[%c0_3, %c0_4] : memref<176x128xf32, #tpu.memory_space<vmem>>, vector<8x32xf32>
    %cst = arith.constant dense<0.000000e+00> : vector<16x32xf32>
    %3 = tpu.matmul %1, %2, %cst {dimension_numbers = #tpu.dot_dimension_numbers<[1], [0], [0], [1], [0, 0, 1, 1], [], []>} : vector<16x8xf32>, vector<8x32xf32>, vector<16x32xf32> -> vector<16x32xf32>
    %c0_5 = arith.constant 0 : index
    %c0_6 = arith.constant 0 : index
    %4 = vector.load %arg5[%c0_5, %c0_6] : memref<48x32xf32, #tpu.memory_space<vmem>>, vector<16x32xf32>
    tpu.vector_store %arg5[%c0_5, %c0_6], %3 {strides = array<i32>} : memref<48x32xf32, #tpu.memory_space<vmem>>, vector<16x32xf32>,
    %c8 = arith.constant 8 : index
    %c0_7 = arith.constant 0 : index
    %5 = vector.load %arg2[%c8, %c0_7] : memref<176x128xf32, #tpu.memory_space<vmem>>, vector<8x32xf32>
    %cst_8 = arith.constant dense<0.000000e+00> : vector<16x32xf32>
    %6 = tpu.matmul %1, %5, %cst_8 {dimension_numbers = #tpu.dot_dimension_numbers<[1], [0], [0], [1], [0, 0, 1, 1], [], []>} : vector<16x8xf32>, vector<8x32xf32>, vector<16x32xf32> -> vector<16x32xf32>
    %c16 = arith.constant 16 : index
    %c0_9 = arith.constant 0 : index
    %7 = vector.load %arg5[%c16, %c0_9] : memref<48x32xf32, #tpu.memory_space<vmem>>, vector<16x32xf32>
    tpu.vector_store %arg5[%c16, %c0_9], %6 {strides = array<i32>} : memref<48x32xf32, #tpu.memory_space<vmem>>, vector<16x32xf32>,
    %c16_10 = arith.constant 16 : index
    %c0_11 = arith.constant 0 : index
    %8 = vector.load %arg2[%c16_10, %c0_11] : memref<176x128xf32, #tpu.memory_space<vmem>>, vector<8x32xf32>
    %cst_12 = arith.constant dense<0.000000e+00> : vector<16x32xf32>
    %9 = tpu.matmul %1, %8, %cst_12 {dimension_numbers = #tpu.dot_dimension_numbers<[1], [0], [0], [1], [0, 0, 1, 1], [], []>} : vector<16x8xf32>, vector<8x32xf32>, vector<16x32xf32> -> vector<16x32xf32>
    %c32 = arith.constant 32 : index
    %c0_13 = arith.constant 0 : index
    %10 = vector.load %arg5[%c32, %c0_13] : memref<48x32xf32, #tpu.memory_space<vmem>>, vector<16x32xf32>
    tpu.vector_store %arg5[%c32, %c0_13], %9 {strides = array<i32>} : memref<48x32xf32, #tpu.memory_space<vmem>>, vector<16x32xf32>,
    %c24 = arith.constant 24 : index
    %c0_14 = arith.constant 0 : index
    %11 = vector.load %arg2[%c24, %c0_14] : memref<176x128xf32, #tpu.memory_space<vmem>>, vector<1x32xf32>
    %c0_15 = arith.constant 0 : index
    %c0_16 = arith.constant 0 : index
    %12 = vector.load %arg5[%c0_15, %c0_16] : memref<48x32xf32, #tpu.memory_space<vmem>>, vector<48x32xf32>
    %cst_17 = arith.constant dense<0.000000e+00> : vector<16x32xf32>
    %13 = tpu.matmul %0, %12, %cst_17 {dimension_numbers = #tpu.dot_dimension_numbers<[1], [0], [0], [1], [0, 0, 1, 1], [], []>} : vector<16x48xf32>, vector<48x32xf32>, vector<16x32xf32> -> vector<16x32xf32>
    %14 = vector.broadcast %11 : vector<1x32xf32> to vector<16x32xf32>
    %15 = arith.addf %13, %14 : vector<16x32xf32>
    %cst_18 = arith.constant 0.000000e+00 : f32
    %16 = vector.broadcast %cst_18 : f32 to vector<16x32xf32>
    %17 = arith.maximumf %15, %16 : vector<16x32xf32>
    %c32_19 = arith.constant 32 : index
    %c0_20 = arith.constant 0 : index
    %18 = vector.load %arg2[%c32_19, %c0_20] : memref<176x128xf32, #tpu.memory_space<vmem>>, vector<32x16xf32>
    %cst_21 = arith.constant dense<0.000000e+00> : vector<16x16xf32>
    %19 = tpu.matmul %17, %18, %cst_21 {dimension_numbers = #tpu.dot_dimension_numbers<[1], [0], [0], [1], [0, 0, 1, 1], [], []>} : vector<16x32xf32>, vector<32x16xf32>, vector<16x16xf32> -> vector<16x16xf32>
    %c0_22 = arith.constant 0 : index
    %c0_23 = arith.constant 0 : index
    %20 = vector.load %arg6[%c0_22, %c0_23] : memref<48x16xf32, #tpu.memory_space<vmem>>, vector<16x16xf32>
    tpu.vector_store %arg6[%c0_22, %c0_23], %19 {strides = array<i32>} : memref<48x16xf32, #tpu.memory_space<vmem>>, vector<16x16xf32>,
    %c64 = arith.constant 64 : index
    %c0_24 = arith.constant 0 : index
    %21 = vector.load %arg2[%c64, %c0_24] : memref<176x128xf32, #tpu.memory_space<vmem>>, vector<32x16xf32>
    %cst_25 = arith.constant dense<0.000000e+00> : vector<16x16xf32>
    %22 = tpu.matmul %17, %21, %cst_25 {dimension_numbers = #tpu.dot_dimension_numbers<[1], [0], [0], [1], [0, 0, 1, 1], [], []>} : vector<16x32xf32>, vector<32x16xf32>, vector<16x16xf32> -> vector<16x16xf32>
    %c16_26 = arith.constant 16 : index
    %c0_27 = arith.constant 0 : index
    %23 = vector.load %arg6[%c16_26, %c0_27] : memref<48x16xf32, #tpu.memory_space<vmem>>, vector<16x16xf32>
    tpu.vector_store %arg6[%c16_26, %c0_27], %22 {strides = array<i32>} : memref<48x16xf32, #tpu.memory_space<vmem>>, vector<16x16xf32>,
    %c96 = arith.constant 96 : index
    %c0_28 = arith.constant 0 : index
    %24 = vector.load %arg2[%c96, %c0_28] : memref<176x128xf32, #tpu.memory_space<vmem>>, vector<32x16xf32>
    %cst_29 = arith.constant dense<0.000000e+00> : vector<16x16xf32>
    %25 = tpu.matmul %17, %24, %cst_29 {dimension_numbers = #tpu.dot_dimension_numbers<[1], [0], [0], [1], [0, 0, 1, 1], [], []>} : vector<16x32xf32>, vector<32x16xf32>, vector<16x16xf32> -> vector<16x16xf32>
    %c32_30 = arith.constant 32 : index
    %c0_31 = arith.constant 0 : index
    %26 = vector.load %arg6[%c32_30, %c0_31] : memref<48x16xf32, #tpu.memory_space<vmem>>, vector<16x16xf32>
    tpu.vector_store %arg6[%c32_30, %c0_31], %25 {strides = array<i32>} : memref<48x16xf32, #tpu.memory_space<vmem>>, vector<16x16xf32>,
    %c128 = arith.constant 128 : index
    %c0_32 = arith.constant 0 : index
    %27 = vector.load %arg2[%c128, %c0_32] : memref<176x128xf32, #tpu.memory_space<vmem>>, vector<1x16xf32>
    %c0_33 = arith.constant 0 : index
    %c0_34 = arith.constant 0 : index
    %28 = vector.load %arg6[%c0_33, %c0_34] : memref<48x16xf32, #tpu.memory_space<vmem>>, vector<48x16xf32>
    %cst_35 = arith.constant dense<0.000000e+00> : vector<16x16xf32>
    %29 = tpu.matmul %0, %28, %cst_35 {dimension_numbers = #tpu.dot_dimension_numbers<[1], [0], [0], [1], [0, 0, 1, 1], [], []>} : vector<16x48xf32>, vector<48x16xf32>, vector<16x16xf32> -> vector<16x16xf32>
    %30 = vector.broadcast %27 : vector<1x16xf32> to vector<16x16xf32>
    %31 = arith.addf %29, %30 : vector<16x16xf32>
    %c0_36 = arith.constant 0 : index
    %c0_37 = arith.constant 0 : index
    %32 = vector.load %arg3[%c0_36, %c0_37] : memref<16x1xi32, #tpu.memory_space<vmem>>, vector<16x1xi32>
    %33 = tpu.iota {dimensions = array<i32: 1>} : vector<16x16xi32>
    %34 = vector.broadcast %32 : vector<16x1xi32> to vector<16x16xi32>
    %35 = arith.cmpi eq, %33, %34 : vector<16x16xi32>
    %36 = arith.extui %35 : vector<16x16xi1> to vector<16x16xi32>
    %37 = arith.sitofp %36 : vector<16x16xi32> to vector<16x16xf32>
    %cst_38 = arith.constant dense<0.000000e+00> : vector<16x16xf32>
    %38 = tpu.matmul %37, %31, %cst_38 {dimension_numbers = #tpu.dot_dimension_numbers<[1], [0], [0], [1], [0, 0, 1, 1], [], []>} : vector<16x16xf32>, vector<16x16xf32>, vector<16x16xf32> -> vector<16x16xf32>
    %39 = vector.extract_strided_slice %38 {offsets = [0, 0], sizes = [8, 16], strides = [1, 1]} : vector<16x16xf32> to vector<8x16xf32>
    %40 = vector.extract_strided_slice %38 {offsets = [8, 0], sizes = [8, 16], strides = [1, 1]} : vector<16x16xf32> to vector<8x16xf32>
    %41 = tpu.concatenate %39, %40 in 1 : vector<8x16xf32>, vector<8x16xf32> -> vector<8x32xf32>
    %c136 = arith.constant 136 : index
    %c0_39 = arith.constant 0 : index
    %42 = vector.load %arg2[%c136, %c0_39] : memref<176x128xf32, #tpu.memory_space<vmem>>, vector<32x128xf32>
    %c168 = arith.constant 168 : index
    %c0_40 = arith.constant 0 : index
    %43 = vector.load %arg2[%c168, %c0_40] : memref<176x128xf32, #tpu.memory_space<vmem>>, vector<1x128xf32>
    %cst_41 = arith.constant dense<0.000000e+00> : vector<8x128xf32>
    %44 = tpu.matmul %41, %42, %cst_41 {dimension_numbers = #tpu.dot_dimension_numbers<[1], [0], [0], [1], [0, 0, 1, 1], [], []>} : vector<8x32xf32>, vector<32x128xf32>, vector<8x128xf32> -> vector<8x128xf32>
    %45 = vector.broadcast %43 : vector<1x128xf32> to vector<8x128xf32>
    %46 = arith.addf %44, %45 : vector<8x128xf32>
    %c0_42 = arith.constant 0 : index
    %c0_43 = arith.constant 0 : index
    %47 = vector.load %arg4[%c0_42, %c0_43] : memref<8x128xf32, #tpu.memory_space<vmem>>, vector<8x128xf32>
    tpu.vector_store %arg4[%c0_42, %c0_43], %46 {strides = array<i32>} : memref<8x128xf32, #tpu.memory_space<vmem>>, vector<8x128xf32>,
    return
  }
}

</mosaic_0001>

<llo_original>
// kernel: octopus_forward.1
$region0: #{octopus_forward.1}
  #allocation0 [shape = 'u32[]', space=smem, size = 0x4, offset = 0x4, fixed_abs, tag = 'smem constant byte address 0x4 - core index']
  #allocation1 [shape = 'u32[72,128]{1,0:T(1,128)}', space=vmem, size = 0x9000, scoped, tag = 'internal scratch']
  #allocation2 [shape = 'f32[48,32]{1,0:T(8,128)}', space=vmem, size = 0x6000, scoped, tag = 'scratch operand']
  #allocation3 [shape = 'f32[48,16]{1,0:T(8,128)}', space=vmem, size = 0x6000, scoped, tag = 'scratch operand']
  %s0 = inlined_call_operand.vmem [shape: f32[16,48], index: 0, kind: input, shape index: {}]
  %s1 = inlined_call_operand.vmem [shape: f32[16,8], index: 1, kind: input, shape index: {}]
  %s2 = inlined_call_operand.hbm [shape: f32[176,128], index: 2, kind: input, shape index: {}]
  %s3 = inlined_call_operand.vmem [shape: s32[16,1], index: 3, kind: input, shape index: {}]
  %s4 = inlined_call_operand.vmem [shape: f32[8,128], index: 4, kind: output, shape index: {}]
  %s5 = sld [smem:[#allocation0]]
  $region30: #{octopus_forward.1} parent=0
    _
  %s7 = ssub.s32 1, %s5
  %s8 = scalar_select 0, %s7, %s5
  $region1: #{octopus_forward.1} parent=0
    #allocation4 [shape = 'u8[90112]{0}', space=vmem, size = 0x16000, scoped, tag = 'input window, operand 2, single buffered']
    #allocation5 [shape = 's32[1]{0}', space=sflag, size = 0x4, scoped, tag = 'scoped memory for octopus_forward.1']
    %9 = vsyncpa [#allocation5], 0
    // Predicated region
    $region2: #{octopus_forward.1} parent=1 // pred_check
      _
    $region3: #{octopus_forward.1} parent=1 // pred_check_branch
      %11 = sbr.rel (0) target = $region5
    $region4: #{octopus_forward.1} parent=1 // pred_region
      _
    $region5: #{octopus_forward.1} parent=1 // pred_fallthru
      _
    // Predicated region
    $region6: #{octopus_forward.1} parent=1 // pred_check
      _
    $region7: #{octopus_forward.1} parent=1 // pred_check_branch
      %13 = sbr.rel (0) target = $region9
    $region8: #{octopus_forward.1} parent=1 // pred_region
      _
    $region9: #{octopus_forward.1} parent=1 // pred_fallthru
      _
    // Predicated region
    $region10: #{octopus_forward.1} parent=1 // pred_check
      _
    $region11: #{octopus_forward.1} parent=1 // pred_check_branch
      %15 = sbr.rel (0) target = $region13
    $region12: #{octopus_forward.1} parent=1 // pred_region
      %17 = vsyncadd [#allocation5], 0
      %s18 = sshll.u32 %s2, 4
      %s19 = int_to_ptr.hbm [resolvable:$true] %s18
      %s20 = sshll.u32 [#allocation4], 4
      %s21 = int_to_ptr.vmem [resolvable:$true] %s20
      %26 = dma.hbm_to_vmem [thread:$0]  %s19, 2816, %s21, [#allocation5], 128, 128, 8
    $region13: #{octopus_forward.1} parent=1 // pred_fallthru
      _
    // Predicated region
    $region14: #{octopus_forward.1} parent=1 // pred_check
      _
    $region15: #{octopus_forward.1} parent=1 // pred_check_branch
      %28 = sbr.rel (0) target = $region17
    $region16: #{octopus_forward.1} parent=1 // pred_region
      _
    $region17: #{octopus_forward.1} parent=1 // pred_fallthru
      _
    // Predicated region
    $region18: #{octopus_forward.1} parent=1 // pred_check
      _
    $region19: #{octopus_forward.1} parent=1 // pred_check_branch
      %30 = sbr.rel (0) target = $region21
    $region20: #{octopus_forward.1} parent=1 // pred_region
      %32 = dma.done [#allocation5], 2816
    $region21: #{octopus_forward.1} parent=1 // pred_fallthru
      _
    %v33 = vld [vmem:[%s0] sm:$0xff]
    %v34 = vld [vmem:[%s0 + $0x8] sm:$0xff]
    %v35 = vld [vmem:[%s1] sm:$0xff]
    %v36 = vld [vmem:[%s1 + $0x8] sm:$0xff]
    %v37 = vld [vmem:[#allocation4] sm:$0xff]
    %vm38 = vcmask 64512
    %v40 = vsel %vm38, %v35, 0
    %v43 = vsel %vm38, %v36, 0
    %45 = vmatpush.msra.mxu0 0.0
    %46 = vmatpush.msra.mxu0 0.0
    %47 = vmatpush.msra.mxu0 0.0
    %48 = vmatpush.msra.mxu0 0.0
    %49 = vmatpush.msra.mxu0 0.0
    %50 = vmatpush.msra.mxu0 0.0
    %51 = vmatpush.msra.mxu0 0.0
    %52 = vmatpush.msra.mxu0 0.0
    %53 = vmatpush.msra.mxu0 0.0
    %54 = vmatpush.msra.mxu0 0.0
    %55 = vmatpush.msra.mxu0 0.0
    %56 = vmatpush.msra.mxu0 0.0
    %57 = vmatpush.msra.mxu0 0.0
    %58 = vmatpush.msra.mxu0 0.0
    %59 = vmatpush.msra.mxu0 0.0
    %60 = vmatpush.msra.mxu0 %v37
    %61 = vmatmul.f32.gmra.mxu0 %v40
    %v62 = vpop.f32.mrf.mxu0
    %v63 = vadd.f32 0.0, %v62
    %64 = vmatmul.f32.gmra.mxu0 %v43
    %v65 = vpop.f32.mrf.mxu0
    %v66 = vadd.f32 0.0, %v65
    %67 = vdwg.mxu0
    %vm68 = vcmask 261120
    %69 = vst.msk [vmem:[#allocation2] sm:$0xff] %vm68, %v63
    %70 = vst.msk [vmem:[#allocation2 + $0x8] sm:$0xff] %vm68, %v66
    %v71 = vld [vmem:[#allocation4 + $0x8] sm:$0xff]
    %72 = vmatpush.msra.mxu0 0.0
    %73 = vmatpush.msra.mxu0 0.0
    %74 = vmatpush.msra.mxu0 0.0
    %75 = vmatpush.msra.mxu0 0.0
    %76 = vmatpush.msra.mxu0 0.0
    %77 = vmatpush.msra.mxu0 0.0
    %78 = vmatpush.msra.mxu0 0.0
    %79 = vmatpush.msra.mxu0 0.0
    %80 = vmatpush.msra.mxu0 0.0
    %81 = vmatpush.msra.mxu0 0.0
    %82 = vmatpush.msra.mxu0 0.0
    %83 = vmatpush.msra.mxu0 0.0
    %84 = vmatpush.msra.mxu0 0.0
    %85 = vmatpush.msra.mxu0 0.0
    %86 = vmatpush.msra.mxu0 0.0
    %87 = vmatpush.msra.mxu0 %v71
    %88 = vmatmul.f32.gmra.mxu0 %v40
    %v89 = vpop.f32.mrf.mxu0
    %v90 = vadd.f32 0.0, %v89
    %91 = vmatmul.f32.gmra.mxu0 %v43
    %v92 = vpop.f32.mrf.mxu0
    %v93 = vadd.f32 0.0, %v92
    %94 = vdwg.mxu0
    %95 = vst.msk [vmem:[#allocation2 + $0x10] sm:$0xff] %vm68, %v90
    %96 = vst.msk [vmem:[#allocation2 + $0x18] sm:$0xff] %vm68, %v93
    %v97 = vld [vmem:[#allocation4 + $0x10] sm:$0xff]
    %98 = vmatpush.msra.mxu0 0.0
    %99 = vmatpush.msra.mxu0 0.0
    %100 = vmatpush.msra.mxu0 0.0
    %101 = vmatpush.msra.mxu0 0.0
    %102 = vmatpush.msra.mxu0 0.0
    %103 = vmatpush.msra.mxu0 0.0
    %104 = vmatpush.msra.mxu0 0.0
    %105 = vmatpush.msra.mxu0 0.0
    %106 = vmatpush.msra.mxu0 0.0
    %107 = vmatpush.msra.mxu0 0.0
    %108 = vmatpush.msra.mxu0 0.0
    %109 = vmatpush.msra.mxu0 0.0
    %110 = vmatpush.msra.mxu0 0.0
    %111 = vmatpush.msra.mxu0 0.0
    %112 = vmatpush.msra.mxu0 0.0
    %113 = vmatpush.msra.mxu0 %v97
    %114 = vmatmul.f32.gmra.mxu0 %v40
    %v115 = vpop.f32.mrf.mxu0
    %v116 = vadd.f32 0.0, %v115
    %117 = vmatmul.f32.gmra.mxu0 %v43
    %v118 = vpop.f32.mrf.mxu0
    %v119 = vadd.f32 0.0, %v118
    %120 = vdwg.mxu0
    %121 = vst.msk [vmem:[#allocation2 + $0x20] sm:$0xff] %vm68, %v116
    %122 = vst.msk [vmem:[#allocation2 + $0x28] sm:$0xff] %vm68, %v119
    %v123 = vld [vmem:[#allocation4 + $0x18] sm:$0x1]
    %v124 = vld [vmem:[#allocation2] sm:$0xff]
    %v125 = vld [vmem:[#allocation2 + $0x8] sm:$0xff]
    %v126 = vld [vmem:[#allocation2 + $0x10] sm:$0xff]
    %v127 = vld [vmem:[#allocation2 + $0x18] sm:$0xff]
    %v128 = vld [vmem:[#allocation2 + $0x20] sm:$0xff]
    %v129 = vld [vmem:[#allocation2 + $0x28] sm:$0xff]
    %v130 = vperm.slane %v123, 0
    %vm131 = vcmask 392192
    %v133 = vsel %vm131, %v33, 0
    %v136 = vsel %vm131, %v34, 0
    %138 = vmatpush.msra.mxu0 0.0
    %139 = vmatpush.msra.mxu0 0.0
    %140 = vmatpush.msra.mxu0 0.0
    %141 = vmatpush.msra.mxu0 0.0
    %142 = vmatpush.msra.mxu0 0.0
    %143 = vmatpush.msra.mxu0 0.0
    %144 = vmatpush.msra.mxu0 0.0
    %145 = vmatpush.msra.mxu0 0.0
    %146 = vmatpush.msra.mxu0 0.0
    %147 = vmatpush.msra.mxu0 0.0
    %148 = vmatpush.msra.mxu0 %v129
    %149 = vmatpush.msra.mxu0 %v128
    %150 = vmatpush.msra.mxu0 %v127
    %151 = vmatpush.msra.mxu0 %v126
    %152 = vmatpush.msra.mxu0 %v125
    %153 = vmatpush.msra.mxu0 %v124
    %154 = vmatmul.f32.gmra.mxu0 %v133
    %v155 = vpop.f32.mrf.mxu0
    %v156 = vadd.f32 %v130, %v155
    %157 = vmatmul.f32.gmra.mxu0 %v136
    %v158 = vpop.f32.mrf.mxu0
    %v159 = vadd.f32 %v130, %v158
    %160 = vdwg.mxu0
    %v161 = vmax.f32 %v156, 0.0
    %v162 = vmax.f32 %v159, 0.0
    %v163 = vld [vmem:[#allocation4 + $0x20] sm:$0xff]
    %v164 = vld [vmem:[#allocation4 + $0x28] sm:$0xff]
    %v165 = vld [vmem:[#allocation4 + $0x30] sm:$0xff]
    %v166 = vld [vmem:[#allocation4 + $0x38] sm:$0xff]
    %v168 = vsel %vm68, %v161, 0
    %v171 = vsel %vm68, %v162, 0
    %173 = vmatpush.msra.mxu0 0.0
    %174 = vmatpush.msra.mxu0 0.0
    %175 = vmatpush.msra.mxu0 0.0
    %176 = vmatpush.msra.mxu0 0.0
    %177 = vmatpush.msra.mxu0 0.0
    %178 = vmatpush.msra.mxu0 0.0
    %179 = vmatpush.msra.mxu0 0.0
    %180 = vmatpush.msra.mxu0 0.0
    %181 = vmatpush.msra.mxu0 0.0
    %182 = vmatpush.msra.mxu0 0.0
    %183 = vmatpush.msra.mxu0 0.0
    %184 = vmatpush.msra.mxu0 0.0
    %185 = vmatpush.msra.mxu0 %v166
    %186 = vmatpush.msra.mxu0 %v165
    %187 = vmatpush.msra.mxu0 %v164
    %188 = vmatpush.msra.mxu0 %v163
    %189 = vmatmul.f32.gmra.mxu0 %v168
    %v190 = vpop.f32.mrf.mxu0
    %v191 = vadd.f32 0.0, %v190
    %192 = vmatmul.f32.gmra.mxu0 %v171
    %v193 = vpop.f32.mrf.mxu0
    %v194 = vadd.f32 0.0, %v193
    %195 = vdwg.mxu0
    %vm196 = vcmask 130048
    %197 = vst.msk [vmem:[#allocation3] sm:$0xff] %vm196, %v191
    %198 = vst.msk [vmem:[#allocation3 + $0x8] sm:$0xff] %vm196, %v194
    %v199 = vld [vmem:[#allocation4 + $0x40] sm:$0xff]
    %v200 = vld [vmem:[#allocation4 + $0x48] sm:$0xff]
    %v201 = vld [vmem:[#allocation4 + $0x50] sm:$0xff]
    %v202 = vld [vmem:[#allocation4 + $0x58] sm:$0xff]
    %203 = vmatpush.msra.mxu0 0.0
    %204 = vmatpush.msra.mxu0 0.0
    %205 = vmatpush.msra.mxu0 0.0
    %206 = vmatpush.msra.mxu0 0.0
    %207 = vmatpush.msra.mxu0 0.0
    %208 = vmatpush.msra.mxu0 0.0
    %209 = vmatpush.msra.mxu0 0.0
    %210 = vmatpush.msra.mxu0 0.0
    %211 = vmatpush.msra.mxu0 0.0
    %212 = vmatpush.msra.mxu0 0.0
    %213 = vmatpush.msra.mxu0 0.0
    %214 = vmatpush.msra.mxu0 0.0
    %215 = vmatpush.msra.mxu0 %v202
    %216 = vmatpush.msra.mxu0 %v201
    %217 = vmatpush.msra.mxu0 %v200
    %218 = vmatpush.msra.mxu0 %v199
    %219 = vmatmul.f32.gmra.mxu0 %v168
    %v220 = vpop.f32.mrf.mxu0
    %v221 = vadd.f32 0.0, %v220
    %222 = vmatmul.f32.gmra.mxu0 %v171
    %v223 = vpop.f32.mrf.mxu0
    %v224 = vadd.f32 0.0, %v223
    %225 = vdwg.mxu0
    %226 = vst.msk [vmem:[#allocation3 + $0x10] sm:$0xff] %vm196, %v221
    %227 = vst.msk [vmem:[#allocation3 + $0x18] sm:$0xff] %vm196, %v224
    %v228 = vld [vmem:[#allocation4 + $0x60] sm:$0xff]
    %v229 = vld [vmem:[#allocation4 + $0x68] sm:$0xff]
    %v230 = vld [vmem:[#allocation4 + $0x70] sm:$0xff]
    %v231 = vld [vmem:[#allocation4 + $0x78] sm:$0xff]
    %232 = vmatpush.msra.mxu0 0.0
    %233 = vmatpush.msra.mxu0 0.0
    %234 = vmatpush.msra.mxu0 0.0
    %235 = vmatpush.msra.mxu0 0.0
    %236 = vmatpush.msra.mxu0 0.0
    %237 = vmatpush.msra.mxu0 0.0
    %238 = vmatpush.msra.mxu0 0.0
    %239 = vmatpush.msra.mxu0 0.0
    %240 = vmatpush.msra.mxu0 0.0
    %241 = vmatpush.msra.mxu0 0.0
    %242 = vmatpush.msra.mxu0 0.0
    %243 = vmatpush.msra.mxu0 0.0
    %244 = vmatpush.msra.mxu0 %v231
    %245 = vmatpush.msra.mxu0 %v230
    %246 = vmatpush.msra.mxu0 %v229
    %247 = vmatpush.msra.mxu0 %v228
    %248 = vmatmul.f32.gmra.mxu0 %v168
    %v249 = vpop.f32.mrf.mxu0
    %v250 = vadd.f32 0.0, %v249
    %251 = vmatmul.f32.gmra.mxu0 %v171
    %v252 = vpop.f32.mrf.mxu0
    %v253 = vadd.f32 0.0, %v252
    %254 = vdwg.mxu0
    %255 = vst.msk [vmem:[#allocation3 + $0x20] sm:$0xff] %vm196, %v250
    %256 = vst.msk [vmem:[#allocation3 + $0x28] sm:$0xff] %vm196, %v253
    %v257 = vld [vmem:[#allocation4 + $0x80] sm:$0x1]
    %v258 = vld [vmem:[#allocation3] sm:$0xff]
    %v259 = vld [vmem:[#allocation3 + $0x8] sm:$0xff]
    %v260 = vld [vmem:[#allocation3 + $0x10] sm:$0xff]
    %v261 = vld [vmem:[#allocation3 + $0x18] sm:$0xff]
    %v262 = vld [vmem:[#allocation3 + $0x20] sm:$0xff]
    %v263 = vld [vmem:[#allocation3 + $0x28] sm:$0xff]
    %v264 = vperm.slane %v257, 0
    %265 = vmatpush.msra.mxu0 0.0
    %266 = vmatpush.msra.mxu0 0.0
    %267 = vmatpush.msra.mxu0 0.0
    %268 = vmatpush.msra.mxu0 0.0
    %269 = vmatpush.msra.mxu0 0.0
    %270 = vmatpush.msra.mxu0 0.0
    %271 = vmatpush.msra.mxu0 0.0
    %272 = vmatpush.msra.mxu0 0.0
    %273 = vmatpush.msra.mxu0 0.0
    %274 = vmatpush.msra.mxu0 0.0
    %275 = vmatpush.msra.mxu0 %v263
    %276 = vmatpush.msra.mxu0 %v262
    %277 = vmatpush.msra.mxu0 %v261
    %278 = vmatpush.msra.mxu0 %v260
    %279 = vmatpush.msra.mxu0 %v259
    %280 = vmatpush.msra.mxu0 %v258
    %281 = vmatmul.f32.gmra.mxu0 %v133
    %v282 = vpop.f32.mrf.mxu0
    %v283 = vadd.f32 %v264, %v282
    %284 = vmatmul.f32.gmra.mxu0 %v136
    %v285 = vpop.f32.mrf.mxu0
    %v286 = vadd.f32 %v264, %v285
    %287 = vdwg.mxu0
    %v288 = vld [vmem:[%s3] sm:$0xff]
    %v289 = vld [vmem:[%s3 + $0x8] sm:$0xff]
    %v290 = vlaneseq
    %v291 = vand.u32 %v290, 127
    %292 = vset.pattern.permute.xlu0 0
    %293 = vperm.xlu0 %292, %v288
    %v294 = vpop.permute.xlu0 %293
    %295 = vset.pattern.permute.xlu0 0
    %296 = vperm.xlu0 %295, %v289
    %v297 = vpop.permute.xlu0 %296
    %vm298 = vcmp.eq.s32.totalorder %v291, %v294
    %vm299 = vcmp.eq.s32.totalorder %v291, %v297
    %v300 = vsel %vm298, 1, 0
    %v301 = vsel %vm299, 1, 0
    %v302 = vcvt.s32.f32 %v300
    %v303 = vcvt.s32.f32 %v301
    %v305 = vsel %vm196, %v302, 0
    %v308 = vsel %vm196, %v303, 0
    %310 = vmatpush.msra.mxu0 0.0
    %311 = vmatpush.msra.mxu0 0.0
    %312 = vmatpush.msra.mxu0 0.0
    %313 = vmatpush.msra.mxu0 0.0
    %314 = vmatpush.msra.mxu0 0.0
    %315 = vmatpush.msra.mxu0 0.0
    %316 = vmatpush.msra.mxu0 0.0
    %317 = vmatpush.msra.mxu0 0.0
    %318 = vmatpush.msra.mxu0 0.0
    %319 = vmatpush.msra.mxu0 0.0
    %320 = vmatpush.msra.mxu0 0.0
    %321 = vmatpush.msra.mxu0 0.0
    %322 = vmatpush.msra.mxu0 0.0
    %323 = vmatpush.msra.mxu0 0.0
    %324 = vmatpush.msra.mxu0 %v286
    %325 = vmatpush.msra.mxu0 %v283
    %326 = vmatmul.f32.gmra.mxu0 %v305
    %v327 = vpop.f32.mrf.mxu0
    %v328 = vadd.f32 0.0, %v327
    %329 = vmatmul.f32.gmra.mxu0 %v308
    %v330 = vpop.f32.mrf.mxu0
    %v331 = vadd.f32 0.0, %v330
    %332 = vdwg.mxu0
    %334 = vrot.lane.b32.xlu0 %v331, 16
    %v335 = vpop.permute.xlu0 %334
    %v337 = vsel %vm196, %v328, %v335
    %v338 = vld [vmem:[#allocation4 + $0x88] sm:$0xff]
    %v339 = vld [vmem:[#allocation4 + $0x90] sm:$0xff]
    %v340 = vld [vmem:[#allocation4 + $0x98] sm:$0xff]
    %v341 = vld [vmem:[#allocation4 + $0xa0] sm:$0xff]
    %v342 = vld [vmem:[#allocation4 + $0xa8] sm:$0x1]
    %v343 = vperm.slane %v342, 0
    %v345 = vsel %vm68, %v337, 0
    %347 = vmatpush.msra.mxu0 0.0
    %348 = vmatpush.msra.mxu0 0.0
    %349 = vmatpush.msra.mxu0 0.0
    %350 = vmatpush.msra.mxu0 0.0
    %351 = vmatpush.msra.mxu0 0.0
    %352 = vmatpush.msra.mxu0 0.0
    %353 = vmatpush.msra.mxu0 0.0
    %354 = vmatpush.msra.mxu0 0.0
    %355 = vmatpush.msra.mxu0 0.0
    %356 = vmatpush.msra.mxu0 0.0
    %357 = vmatpush.msra.mxu0 0.0
    %358 = vmatpush.msra.mxu0 0.0
    %359 = vmatpush.msra.mxu0 %v341
    %360 = vmatpush.msra.mxu0 %v340
    %361 = vmatpush.msra.mxu0 %v339
    %362 = vmatpush.msra.mxu0 %v338
    %363 = vmatmul.f32.gmra.mxu0 %v345
    %v364 = vpop.f32.mrf.mxu0
    %v365 = vadd.f32 %v343, %v364
    %366 = vdwg.mxu0
    %367 = vst [vmem:[%s4] sm:$0xff] %v365
    // Predicated region
    $region22: #{octopus_forward.1} parent=1 // pred_check
      _
    $region23: #{octopus_forward.1} parent=1 // pred_check_branch
      %369 = sbr.rel (0) target = $region25
    $region24: #{octopus_forward.1} parent=1 // pred_region
      _
    $region25: #{octopus_forward.1} parent=1 // pred_fallthru
      _
    // Predicated region
    $region26: #{octopus_forward.1} parent=1 // pred_check
      _
    $region27: #{octopus_forward.1} parent=1 // pred_check_branch
      %371 = sbr.rel (0) target = $region29
    $region28: #{octopus_forward.1} parent=1 // pred_region
      _
    $region29: #{octopus_forward.1} parent=1 // pred_fallthru
      _
    %372 = vsyncpa [#allocation5], 1

</llo_original>
